<compile_context>
chip_gen: v7x
topology: tpu7x:2x2x1
jax: 0.10.0
libtpu: 0.0.40
codegen_flags: <defaults>
</compile_context>

<pallas_src>
import functools

import jax
import jax.numpy as jnp
from jax.experimental import pallas as pl
from jax.experimental.pallas import tpu as pltpu


def _sublane(dtype):
    """Minimum sublane-aligned row multiple for the given dtype."""
    itemsize = jnp.dtype(dtype).itemsize
    return max(8, 32 // itemsize)   # 8 for f32, 16 for bf16, 32 for int8/fp8


def _num_tensorcores():
    """2 on megacore chips (v7x), else 1.  Best-effort; defaults to 1."""
    try:
        kind = jax.devices()[0].device_kind.lower()
    except Exception:
        return 1
    return 2 if "v7" in kind else 1


# -----------------------------------------------------------------------------
# Kernels
# -----------------------------------------------------------------------------

def _layernorm_kernel(x_ref, w_ref, b_ref, o_ref, *, eps, c_in):
    """Generic path: one logical row per sublane row, reduce along lanes."""
    x = x_ref[...].astype(jnp.float32)            # (tile_rows, c_in)

    # Single-sweep, independent reductions (sum and sum-of-squares) so the two
    # XLU cross-lane reduces can pipeline instead of serializing on `mean`.
    s = jnp.sum(x, axis=-1, keepdims=True)
    ss = jnp.sum(x * x, axis=-1, keepdims=True)
    inv_c = jnp.float32(1.0 / c_in)
    mean = s * inv_c
    # Biased variance (divide by N), matching torch layer_norm.  Clamp at 0:
    # E[x^2] - mean^2 can cancel to a slightly negative number in f32.
    var = jnp.maximum(ss * inv_c - mean * mean, 0.0)
    inv = jax.lax.rsqrt(var + jnp.float32(eps))

    w = w_ref[...].astype(jnp.float32)
    b = b_ref[...].astype(jnp.float32)
    # TODO(synk): on v7x with bf16 I/O, do this affine tail in bf16 if the
    # VALU slot saturates (keep mean/var math in f32).
    o_ref[...] = ((x - mean) * inv * w + b).astype(o_ref.dtype)


def _layernorm_folded_kernel(x_ref, w_ref, b_ref, s_ref, o_ref, *, eps, c_in):
    """Lane-dense path for c_in < 128: k = 128//c_in logical rows are packed
    into each 128-lane physical row.  Per-row segment sums are computed with a
    block-diagonal 0/1 matrix on the MXU; the bf16 hi/lo split keeps the sums
    exact to ~2^-17 relative regardless of MXU input precision, while using
    cheap single-pass bf16 matmuls."""
    x = x_ref[...].astype(jnp.float32)            # (tile_rows, 128)
    S = s_ref[...]                                # (128, 128) bf16 block-diag of ones

    def seg_sum(v):
        hi = v.astype(jnp.bfloat16)                                  # exact in bf16
        lo = (v - hi.astype(jnp.float32)).astype(jnp.bfloat16)       # residual
        return (jnp.dot(hi, S, preferred_element_type=jnp.float32) +
                jnp.dot(lo, S, preferred_element_type=jnp.float32))

    s = seg_sum(x)                                # per-segment sums, broadcast in-segment
    ss = seg_sum(x * x)
    inv_c = jnp.float32(1.0 / c_in)
    mean = s * inv_c
    var = jnp.maximum(ss * inv_c - mean * mean, 0.0)
    inv = jax.lax.rsqrt(var + jnp.float32(eps))

    w = w_ref[...].astype(jnp.float32)            # weight/bias pre-tiled k times
    b = b_ref[...].astype(jnp.float32)
    o_ref[...] = ((x - mean) * inv * w + b).astype(o_ref.dtype)


# -----------------------------------------------------------------------------
# Wrapper
# -----------------------------------------------------------------------------

def layer_norm_pallas(x, weight, bias, eps=1e-5, *, max_tile_rows=4096,
                      vmem_tile_budget_bytes=20 * 1024 * 1024):
    """LayerNorm over the last dim of x with affine params weight/bias."""
    orig_shape = x.shape
    c_in = orig_shape[-1]
    rows = 1
    for d in orig_shape[:-1]:
        rows *= d

    x2 = x.reshape(rows, c_in)                    # contiguity-preserving (free)
    w2 = weight.reshape(1, c_in)
    b2 = bias.reshape(1, c_in)

    # ---- Lane-dense folding for narrow hidden sizes -------------------------
    k = 128 // c_in if (c_in < 128 and 128 % c_in == 0) else 1
    folded = (k > 1) and (rows % k == 0)
    # TODO(synk): c_in that is not a divisor/multiple of 128 (or rows % k != 0)
    # still takes the masked-store generic path.

    if folded:
        width = 128
        n_rows = rows // k
        x2 = x2.reshape(n_rows, width)            # still a free row-major collapse
        w2 = jnp.tile(w2, (1, k))                 # same weights for every segment
        b2 = jnp.tile(b2, (1, k))
        seg = jnp.arange(width, dtype=jnp.int32) // c_in
        smat = (seg[:, None] == seg[None, :]).astype(jnp.bfloat16)  # (128,128)
        kernel = functools.partial(_layernorm_folded_kernel, eps=eps, c_in=c_in)
        extra_inputs = (smat,)
        extra_specs = (pl.BlockSpec((width, width), lambda i: (0, 0)),)
        n_f32_tmp = 6     # x, x*x, hi/lo, two segment-sum slabs, y
    else:
        width = c_in
        n_rows = rows
        kernel = functools.partial(_layernorm_kernel, eps=eps, c_in=c_in)
        extra_inputs = ()
        extra_specs = ()
        n_f32_tmp = 3     # x (f32 upcast), x*x, y

    sub = _sublane(x.dtype)
    itemsize = jnp.dtype(x.dtype).itemsize

    # ---- Row-tile sizing -----------------------------------------------------
    # Per-row VMEM footprint = double-buffered in + out tiles plus the
    # in-kernel f32 intermediates (the latter is what matters on v7x's 64 MiB
    # VMEM; on v5e/v6e this is conservative but still near the 85% roofline
    # knee measured for >=512-row tiles).
    bytes_per_row = 4 * width * itemsize + 4 * width * n_f32_tmp
    tr = vmem_tile_budget_bytes // max(bytes_per_row, 1)
    tr = max(sub, min(tr, max_tile_rows))
    tr = (tr // sub) * sub                        # sublane-aligned

    if tr >= n_rows:
        # Small problem.  A single grid step is optimal on single-TC chips
        # (v5e/v6e: the grid is a serial loop, a split only adds ~0.35us).
        # Only split into 2 steps on v7x, where the "parallel" axis is sharded
        # across both TensorCores.
        if _num_tensorcores() > 1 and n_rows > sub:
            tr = max(sub, pl.cdiv(pl.cdiv(n_rows, 2), sub) * sub)
        else:
            tr = n_rows      # block dim == full array dim: always legal

    # No padding: Pallas masks the ragged last block.  Reads of the padded
    # tail are undefined, but rows are independent and writes past n_rows are
    # dropped, so valid rows are unaffected.
    grid = (pl.cdiv(n_rows, tr),)

    out = pl.pallas_call(
        kernel,
        out_shape=jax.ShapeDtypeStruct((n_rows, width), x.dtype),
        grid_spec=pltpu.PrefetchScalarGridSpec(
            num_scalar_prefetch=0,
            grid=grid,
            in_specs=[
                pl.BlockSpec((tr, width), lambda i: (i, 0)),
                pl.BlockSpec((1, width), lambda i: (0, 0)),   # resident weight
                pl.BlockSpec((1, width), lambda i: (0, 0)),   # resident bias
                *extra_specs,                                  # resident seg-sum matrix
            ],
            out_specs=pl.BlockSpec((tr, width), lambda i: (i, 0)),
        ),
        compiler_params=pltpu.CompilerParams(
            dimension_semantics=("parallel",),
            # Safe on every generation (v5e/v6e: 128 MiB physical, v7x: 64 MiB)
            # and well above the estimated tile footprint.
            vmem_limit_bytes=32 * 1024 * 1024,
        ),
    )(x2, w2, b2, *extra_inputs)

    return out.reshape(orig_shape)


class LayerNorm:
    """JAX/Pallas port of the PyTorch LayerNorm module (forward only)."""

    def __init__(self, c_in, eps=1e-5):
        self.c_in = c_in
        self.eps = eps
        # deterministic init matching torch: weight = ones, bias = zeros
        self.weight = jnp.ones((c_in,), dtype=jnp.float32)
        self.bias = jnp.zeros((c_in,), dtype=jnp.float32)

    def __call__(self, x):
        return layer_norm_pallas(x, self.weight, self.bias, self.eps)


def _reference(x, w, b, eps):
    xf = x.astype(jnp.float32)
    mean = jnp.mean(xf, axis=-1, keepdims=True)
    var = jnp.mean((xf - mean) ** 2, axis=-1, keepdims=True)
    y = (xf - mean) / jnp.sqrt(var + eps) * w + b
    return y.astype(x.dtype)


if __name__ == "__main__":
    key = jax.random.PRNGKey(0)
    k1, k2 = jax.random.split(key)

    # Narrow hidden size (exercises the lane-folded path): hidden=32 -> 4 rows
    # are packed per 128-lane physical row.
    batch, seq, hidden = 2, 16, 32
    x = jax.random.normal(k1, (batch, seq, hidden), dtype=jnp.float32)
    ln = LayerNorm(hidden, eps=1e-5)
    out = jax.block_until_ready(ln(x))
    ref = _reference(x, ln.weight, ln.bias, ln.eps)
    assert out.shape == x.shape
    assert jnp.max(jnp.abs(out - ref)) < 2e-4, "folded-path mismatch vs reference"

    # Wide hidden with a row count not divisible by the tile: exercises the
    # ragged last grid block that replaced the old pad + slice epilogue.
    x2 = jax.random.normal(k2, (3, 7, 256), dtype=jnp.float32)
    w2 = jnp.ones((256,), dtype=jnp.float32)
    b2 = jnp.zeros((256,), dtype=jnp.float32)
    out2 = jax.block_until_ready(
        layer_norm_pallas(x2, w2, b2, 1e-5, max_tile_rows=8))
    ref2 = _reference(x2, w2, b2, 1e-5)
    assert out2.shape == x2.shape
    assert jnp.max(jnp.abs(out2 - ref2)) < 2e-4, "generic-path mismatch vs reference"

    print("KERNEL_OK")
</pallas_src>

<mosaic_0001>
module attributes {stable_mosaic.version = 11 : i64} {
  func.func @_layernorm_folded_kernel(%arg0: i32, %arg1: memref<8x128xf32, #tpu.memory_space<vmem>>, %arg2: memref<1x128xf32, #tpu.memory_space<vmem>>, %arg3: memref<1x128xf32, #tpu.memory_space<vmem>>, %arg4: memref<128x128xbf16, #tpu.memory_space<vmem>>, %arg5: memref<8x128xf32, #tpu.memory_space<vmem>>) attributes {dimension_semantics = [#tpu.dimension_semantics<parallel>], iteration_bounds = array<i64: 1>, scalar_prefetch = 0 : i64, scratch_operands = 0 : i64, tpu.core_type = #tpu.core_type<tc>, window_params = [{transform_indices = @transform_0, window_bounds = array<i64: 8, 128>}, {pipeline_mode = #tpu.pipeline_mode<synchronous>, transform_indices = @transform_1, window_bounds = array<i64: 1, 128>}, {pipeline_mode = #tpu.pipeline_mode<synchronous>, transform_indices = @transform_2, window_bounds = array<i64: 1, 128>}, {pipeline_mode = #tpu.pipeline_mode<synchronous>, transform_indices = @transform_3, window_bounds = array<i64: 128, 128>}, {transform_indices = @transform_4, window_bounds = array<i64: 8, 128>}]} {
    %c0 = arith.constant 0 : index
    %c0_0 = arith.constant 0 : index
    %0 = vector.load %arg1[%c0, %c0_0] : memref<8x128xf32, #tpu.memory_space<vmem>>, vector<8x128xf32>
    %c0_1 = arith.constant 0 : index
    %c0_2 = arith.constant 0 : index
    %1 = vector.load %arg4[%c0_1, %c0_2] : memref<128x128xbf16, #tpu.memory_space<vmem>>, vector<128x128xbf16>
    %2 = arith.truncf %0 : vector<8x128xf32> to vector<8x128xbf16>
    %3 = arith.extf %2 : vector<8x128xbf16> to vector<8x128xf32>
    %4 = arith.subf %0, %3 : vector<8x128xf32>
    %5 = arith.truncf %4 : vector<8x128xf32> to vector<8x128xbf16>
    %cst = arith.constant dense<0.000000e+00> : vector<8x128xf32>
    %6 = tpu.matmul %2, %1, %cst {dimension_numbers = #tpu.dot_dimension_numbers<[1], [0], [0], [1], [0, 0, 1, 1], [], []>} : vector<8x128xbf16>, vector<128x128xbf16>, vector<8x128xf32> -> vector<8x128xf32>
    %cst_3 = arith.constant dense<0.000000e+00> : vector<8x128xf32>
    %7 = tpu.matmul %5, %1, %cst_3 {dimension_numbers = #tpu.dot_dimension_numbers<[1], [0], [0], [1], [0, 0, 1, 1], [], []>} : vector<8x128xbf16>, vector<128x128xbf16>, vector<8x128xf32> -> vector<8x128xf32>
    %8 = arith.addf %6, %7 : vector<8x128xf32>
    %9 = arith.mulf %0, %0 : vector<8x128xf32>
    %10 = arith.truncf %9 : vector<8x128xf32> to vector<8x128xbf16>
    %11 = arith.extf %10 : vector<8x128xbf16> to vector<8x128xf32>
    %12 = arith.subf %9, %11 : vector<8x128xf32>
    %13 = arith.truncf %12 : vector<8x128xf32> to vector<8x128xbf16>
    %cst_4 = arith.constant dense<0.000000e+00> : vector<8x128xf32>
    %14 = tpu.matmul %10, %1, %cst_4 {dimension_numbers = #tpu.dot_dimension_numbers<[1], [0], [0], [1], [0, 0, 1, 1], [], []>} : vector<8x128xbf16>, vector<128x128xbf16>, vector<8x128xf32> -> vector<8x128xf32>
    %cst_5 = arith.constant dense<0.000000e+00> : vector<8x128xf32>
    %15 = tpu.matmul %13, %1, %cst_5 {dimension_numbers = #tpu.dot_dimension_numbers<[1], [0], [0], [1], [0, 0, 1, 1], [], []>} : vector<8x128xbf16>, vector<128x128xbf16>, vector<8x128xf32> -> vector<8x128xf32>
    %16 = arith.addf %14, %15 : vector<8x128xf32>
    %cst_6 = arith.constant 3.125000e-02 : f32
    %17 = vector.broadcast %cst_6 : f32 to vector<8x128xf32>
    %18 = arith.mulf %8, %17 : vector<8x128xf32>
    %cst_7 = arith.constant 3.125000e-02 : f32
    %19 = vector.broadcast %cst_7 : f32 to vector<8x128xf32>
    %20 = arith.mulf %16, %19 : vector<8x128xf32>
    %21 = arith.mulf %18, %18 : vector<8x128xf32>
    %22 = arith.subf %20, %21 : vector<8x128xf32>
    %cst_8 = arith.constant 0.000000e+00 : f32
    %23 = vector.broadcast %cst_8 : f32 to vector<8x128xf32>
    %24 = arith.maximumf %22, %23 : vector<8x128xf32>
    %cst_9 = arith.constant 9.99999974E-6 : f32
    %25 = vector.broadcast %cst_9 : f32 to vector<8x128xf32>
    %26 = arith.addf %24, %25 : vector<8x128xf32>
    %27 = math.rsqrt %26 : vector<8x128xf32>
    %c0_10 = arith.constant 0 : index
    %c0_11 = arith.constant 0 : index
    %28 = vector.load %arg2[%c0_10, %c0_11] : memref<1x128xf32, #tpu.memory_space<vmem>>, vector<1x128xf32>
    %c0_12 = arith.constant 0 : index
    %c0_13 = arith.constant 0 : index
    %29 = vector.load %arg3[%c0_12, %c0_13] : memref<1x128xf32, #tpu.memory_space<vmem>>, vector<1x128xf32>
    %30 = arith.subf %0, %18 : vector<8x128xf32>
    %31 = arith.mulf %30, %27 : vector<8x128xf32>
    %32 = vector.broadcast %28 : vector<1x128xf32> to vector<8x128xf32>
    %33 = arith.mulf %31, %32 : vector<8x128xf32>
    %34 = vector.broadcast %29 : vector<1x128xf32> to vector<8x128xf32>
    %35 = arith.addf %33, %34 : vector<8x128xf32>
    %c0_14 = arith.constant 0 : index
    %c0_15 = arith.constant 0 : index
    %36 = vector.load %arg5[%c0_14, %c0_15] : memref<8x128xf32, #tpu.memory_space<vmem>>, vector<8x128xf32>
    tpu.vector_store %arg5[%c0_14, %c0_15], %35 {strides = array<i32>} : memref<8x128xf32, #tpu.memory_space<vmem>>, vector<8x128xf32>,
    return
  }
  func.func @transform_0(%arg0: i32) -> (i32, i32) {
    %c0_i32 = arith.constant 0 : i32
    %c0_i32_0 = arith.constant 0 : i32
    return %arg0, %c0_i32 : i32, i32
  }
  func.func @transform_1(%arg0: i32) -> (i32, i32) {
    %c0_i32 = arith.constant 0 : i32
    %c0_i32_0 = arith.constant 0 : i32
    %c0_i32_1 = arith.constant 0 : i32
    return %c0_i32, %c0_i32_0 : i32, i32
  }
  func.func @transform_2(%arg0: i32) -> (i32, i32) {
    %c0_i32 = arith.constant 0 : i32
    %c0_i32_0 = arith.constant 0 : i32
    %c0_i32_1 = arith.constant 0 : i32
    return %c0_i32, %c0_i32_0 : i32, i32
  }
  func.func @transform_3(%arg0: i32) -> (i32, i32) {
    %c0_i32 = arith.constant 0 : i32
    %c0_i32_0 = arith.constant 0 : i32
    %c0_i32_1 = arith.constant 0 : i32
    return %c0_i32, %c0_i32_0 : i32, i32
  }
  func.func @transform_4(%arg0: i32) -> (i32, i32) {
    %c0_i32 = arith.constant 0 : i32
    %c0_i32_0 = arith.constant 0 : i32
    return %arg0, %c0_i32 : i32, i32
  }
}

</mosaic_0001>

<llo_original>
// kernel: tpu_custom_call.1
$region0: #{tpu_custom_call.1}
  #allocation0 [shape = 'u32[]', space=smem, size = 0x4, offset = 0x4, fixed_abs, tag = 'smem constant byte address 0x4 - core index']
  #allocation1 [shape = 'u32[144,128]{1,0:T(1,128)}', space=vmem, size = 0x12000, scoped, tag = 'internal scratch']
  %s0 = inlined_call_operand.hbm [shape: f32[8,128], index: 0, kind: input, shape index: {}]
  %s1 = inlined_call_operand.vmem [shape: f32[1,128], index: 1, kind: input, shape index: {}]
  %s2 = inlined_call_operand.vmem [shape: f32[1,128], index: 2, kind: input, shape index: {}]
  %s3 = inlined_call_operand.hbm [shape: bf16[128,128], index: 3, kind: input, shape index: {}]
  %s4 = inlined_call_operand.hbm [shape: f32[8,128], index: 4, kind: output, shape index: {}]
  %s5 = sld [smem:[#allocation0]]
  $region34: #{tpu_custom_call.1} parent=0
    _
  %s7 = ssub.s32 1, %s5
  %s8 = scalar_select 0, %s7, %s5
  $region1: #{tpu_custom_call.1} parent=0
    #allocation2 [shape = 'u8[4096]{0}', space=vmem, size = 0x1000, scoped, tag = 'input window, operand 0, single buffered']
    #allocation3 [shape = 's32[1]{0}', space=sflag, size = 0x4, scoped, tag = 'scoped memory for tpu_custom_call.1']
    #allocation4 [shape = 's32[1]{0}', space=sflag, size = 0x4, scoped, tag = 'scoped memory for tpu_custom_call.1']
    #allocation5 [shape = 'u8[32768]{0}', space=vmem, size = 0x8000, scoped, tag = 'input window, operand 3, single buffered']
    #allocation6 [shape = 's32[1]{0}', space=sflag, size = 0x4, scoped, tag = 'scoped memory for tpu_custom_call.1']
    #allocation7 [shape = 'u8[4096]{0}', space=vmem, size = 0x1000, scoped, tag = 'output window, operand 0, single buffered']
    %9 = vsyncpa [#allocation3], 0
    %10 = vsyncpa [#allocation6], 0
    %11 = vsyncpa [#allocation4], 0
    // Predicated region
    $region2: #{tpu_custom_call.1} parent=1 // pred_check
      _
    $region3: #{tpu_custom_call.1} parent=1 // pred_check_branch
      %13 = sbr.rel (0) target = $region5
    $region4: #{tpu_custom_call.1} parent=1 // pred_region
      %s15 = ssub.s32 128, 128
      %16 = vsyncadd [#allocation3], %s15
      %s18 = sshll.u32 [#allocation2], 4
      %s19 = int_to_ptr.vmem [resolvable:$true] %s18
      %21 = dma.hbm_to_vmem [thread:$0]  %s0, 128, %s19, [#allocation3]
    $region5: #{tpu_custom_call.1} parent=1 // pred_fallthru
      _
    // Predicated region
    $region6: #{tpu_custom_call.1} parent=1 // pred_check
      _
    $region7: #{tpu_custom_call.1} parent=1 // pred_check_branch
      %23 = sbr.rel (0) target = $region9
    $region8: #{tpu_custom_call.1} parent=1 // pred_region
      _
    $region9: #{tpu_custom_call.1} parent=1 // pred_fallthru
      _
    // Predicated region
    $region10: #{tpu_custom_call.1} parent=1 // pred_check
      _
    $region11: #{tpu_custom_call.1} parent=1 // pred_check_branch
      %25 = sbr.rel (0) target = $region13
    $region12: #{tpu_custom_call.1} parent=1 // pred_region
      _
    $region13: #{tpu_custom_call.1} parent=1 // pred_fallthru
      _
    // Predicated region
    $region14: #{tpu_custom_call.1} parent=1 // pred_check
      _
    $region15: #{tpu_custom_call.1} parent=1 // pred_check_branch
      %27 = sbr.rel (0) target = $region17
    $region16: #{tpu_custom_call.1} parent=1 // pred_region
      %s29 = ssub.s32 1024, 1024
      %30 = vsyncadd [#allocation6], %s29
      %s31 = sshll.u32 [#allocation5], 4
      %s32 = int_to_ptr.vmem [resolvable:$true] %s31
      %37 = dma.hbm_to_vmem [thread:$0]  %s3, 1024, %s32, [#allocation6], 64, 64, 4
    $region17: #{tpu_custom_call.1} parent=1 // pred_fallthru
      _
    // Predicated region
    $region18: #{tpu_custom_call.1} parent=1 // pred_check
      _
    $region19: #{tpu_custom_call.1} parent=1 // pred_check_branch
      %39 = sbr.rel (0) target = $region21
    $region20: #{tpu_custom_call.1} parent=1 // pred_region
      %40 = dma.done [#allocation3], 128
    $region21: #{tpu_custom_call.1} parent=1 // pred_fallthru
      _
    // Predicated region
    $region22: #{tpu_custom_call.1} parent=1 // pred_check
      _
    $region23: #{tpu_custom_call.1} parent=1 // pred_check_branch
      %42 = sbr.rel (0) target = $region25
    $region24: #{tpu_custom_call.1} parent=1 // pred_region
      %43 = dma.done [#allocation6], 1024
    $region25: #{tpu_custom_call.1} parent=1 // pred_fallthru
      _
    %v45 = vld [vmem:[#allocation2] sm:$0xff]
    %v46 = vld [vmem:[#allocation5] sm:$0xf]
    %v47 = vld [vmem:[#allocation5 + $0x4] sm:$0xf]
    %v48 = vld [vmem:[#allocation5 + $0x8] sm:$0xf]
    %v49 = vld [vmem:[#allocation5 + $0xc] sm:$0xf]
    %v50 = vld [vmem:[#allocation5 + $0x10] sm:$0xf]
    %v51 = vld [vmem:[#allocation5 + $0x14] sm:$0xf]
    %v52 = vld [vmem:[#allocation5 + $0x18] sm:$0xf]
    %v53 = vld [vmem:[#allocation5 + $0x1c] sm:$0xf]
    %v54 = vld [vmem:[#allocation5 + $0x20] sm:$0xf]
    %v55 = vld [vmem:[#allocation5 + $0x24] sm:$0xf]
    %v56 = vld [vmem:[#allocation5 + $0x28] sm:$0xf]
    %v57 = vld [vmem:[#allocation5 + $0x2c] sm:$0xf]
    %v58 = vld [vmem:[#allocation5 + $0x30] sm:$0xf]
    %v59 = vld [vmem:[#allocation5 + $0x34] sm:$0xf]
    %v60 = vld [vmem:[#allocation5 + $0x38] sm:$0xf]
    %v61 = vld [vmem:[#allocation5 + $0x3c] sm:$0xf]
    %v62 = vpack.c.bf16 %v45, %v45
    %v63 = vunpack.c.l.bf16 %v62
    %v64 = vsub.f32 %v45, %v63
    %v65 = vpack.c.bf16 %v64, %v64
    %v82 = vunpack.c.l.b16 %v46
    %v83 = vunpack.c.l.b16 %v47
    %v84 = vunpack.c.l.b16 %v48
    %v85 = vunpack.c.l.b16 %v49
    %v86 = vunpack.c.l.b16 %v50
    %v87 = vunpack.c.l.b16 %v51
    %v88 = vunpack.c.l.b16 %v52
    %v89 = vunpack.c.l.b16 %v53
    %v90 = vunpack.c.l.b16 %v54
    %v91 = vunpack.c.l.b16 %v55
    %v92 = vunpack.c.l.b16 %v56
    %v93 = vunpack.c.l.b16 %v57
    %v94 = vunpack.c.l.b16 %v58
    %v95 = vunpack.c.l.b16 %v59
    %v96 = vunpack.c.l.b16 %v60
    %v97 = vunpack.c.l.b16 %v61
    %v98 = vpack.c.b16 %v83, %v82
    %v99 = vpack.c.b16 %v85, %v84
    %v100 = vpack.c.b16 %v87, %v86
    %v101 = vpack.c.b16 %v89, %v88
    %v102 = vpack.c.b16 %v91, %v90
    %v103 = vpack.c.b16 %v93, %v92
    %v104 = vpack.c.b16 %v95, %v94
    %v105 = vpack.c.b16 %v97, %v96
    %114 = vmatprep.subr.bf16.mxu0 0
    %115 = vmatpush1.bf16.msra.mxu0 %v98
    %116 = vmatprep.subr.bf16.mxu0 0
    %117 = vmatpush1.bf16.msra.mxu0 %v99
    %118 = vmatprep.subr.bf16.mxu0 0
    %119 = vmatpush1.bf16.msra.mxu0 %v100
    %120 = vmatprep.subr.bf16.mxu0 0
    %121 = vmatpush1.bf16.msra.mxu0 %v101
    %122 = vmatprep.subr.bf16.mxu0 0
    %123 = vmatpush1.bf16.msra.mxu0 %v102
    %124 = vmatprep.subr.bf16.mxu0 0
    %125 = vmatpush1.bf16.msra.mxu0 %v103
    %126 = vmatprep.subr.bf16.mxu0 0
    %127 = vmatpush1.bf16.msra.mxu0 %v104
    %128 = vmatprep.subr.bf16.mxu0 0
    %129 = vmatpush1.bf16.msra.mxu0 %v105
    %130 = vmatprep.subr.bf16.mxu0 0
    %131 = vmatpush1.bf16.msra.mxu0 0
    %132 = vmatprep.subr.bf16.mxu0 0
    %133 = vmatpush1.bf16.msra.mxu0 0
    %134 = vmatprep.subr.bf16.mxu0 0
    %135 = vmatpush1.bf16.msra.mxu0 0
    %136 = vmatprep.subr.bf16.mxu0 0
    %137 = vmatpush1.bf16.msra.mxu0 0
    %138 = vmatprep.subr.bf16.mxu0 0
    %139 = vmatpush1.bf16.msra.mxu0 0
    %140 = vmatprep.subr.bf16.mxu0 0
    %141 = vmatpush1.bf16.msra.mxu0 0
    %142 = vmatprep.subr.bf16.mxu0 0
    %143 = vmatpush1.bf16.msra.mxu0 0
    %144 = vmatprep.subr.bf16.mxu0 0
    %145 = vmatpush1.bf16.msra.mxu0 0
    %146 = vmatprep.mubr.bf16.mxu0 0
    %147 = vmatmul.mubr.bf16.gmra.mrb[0].mxu0 %v65
    %v148 = vpop.f32.mrb[0].mxu0
    %v149 = vadd.f32 0.0, %v148
    %v150 = vpop.f32.mrb[0].mxu0
    %v151 = vpop.f32.mrb[0].mxu0
    %v152 = vpop.f32.mrb[0].mxu0
    %153 = vdwg.mxu0
    %154 = vmatprep.subr.bf16.mxu0 0
    %155 = vmatpush1.bf16.msra.mxu0 %v98
    %156 = vmatprep.subr.bf16.mxu0 0
    %157 = vmatpush1.bf16.msra.mxu0 %v99
    %158 = vmatprep.subr.bf16.mxu0 0
    %159 = vmatpush1.bf16.msra.mxu0 %v100
    %160 = vmatprep.subr.bf16.mxu0 0
    %161 = vmatpush1.bf16.msra.mxu0 %v101
    %162 = vmatprep.subr.bf16.mxu0 0
    %163 = vmatpush1.bf16.msra.mxu0 %v102
    %164 = vmatprep.subr.bf16.mxu0 0
    %165 = vmatpush1.bf16.msra.mxu0 %v103
    %166 = vmatprep.subr.bf16.mxu0 0
    %167 = vmatpush1.bf16.msra.mxu0 %v104
    %168 = vmatprep.subr.bf16.mxu0 0
    %169 = vmatpush1.bf16.msra.mxu0 %v105
    %170 = vmatprep.subr.bf16.mxu0 0
    %171 = vmatpush1.bf16.msra.mxu0 0
    %172 = vmatprep.subr.bf16.mxu0 0
    %173 = vmatpush1.bf16.msra.mxu0 0
    %174 = vmatprep.subr.bf16.mxu0 0
    %175 = vmatpush1.bf16.msra.mxu0 0
    %176 = vmatprep.subr.bf16.mxu0 0
    %177 = vmatpush1.bf16.msra.mxu0 0
    %178 = vmatprep.subr.bf16.mxu0 0
    %179 = vmatpush1.bf16.msra.mxu0 0
    %180 = vmatprep.subr.bf16.mxu0 0
    %181 = vmatpush1.bf16.msra.mxu0 0
    %182 = vmatprep.subr.bf16.mxu0 0
    %183 = vmatpush1.bf16.msra.mxu0 0
    %184 = vmatprep.subr.bf16.mxu0 0
    %185 = vmatpush1.bf16.msra.mxu0 0
    %186 = vmatprep.mubr.bf16.mxu0 0
    %187 = vmatmul.mubr.bf16.gmra.mrb[0].mxu0 %v62
    %v188 = vpop.f32.mrb[0].mxu0
    %v189 = vadd.f32 %v149, %v188
    %v190 = vpop.f32.mrb[0].mxu0
    %v191 = vpop.f32.mrb[0].mxu0
    %v192 = vpop.f32.mrb[0].mxu0
    %193 = vdwg.mxu0
    %v194 = vmul.f32 %v45, %v45
    %v195 = vpack.c.bf16 %v194, %v194
    %v196 = vunpack.c.l.bf16 %v195
    %v197 = vsub.f32 %v194, %v196
    %v198 = vpack.c.bf16 %v197, %v197
    %199 = vmatprep.subr.bf16.mxu0 0
    %200 = vmatpush1.bf16.msra.mxu0 %v98
    %201 = vmatprep.subr.bf16.mxu0 0
    %202 = vmatpush1.bf16.msra.mxu0 %v99
    %203 = vmatprep.subr.bf16.mxu0 0
    %204 = vmatpush1.bf16.msra.mxu0 %v100
    %205 = vmatprep.subr.bf16.mxu0 0
    %206 = vmatpush1.bf16.msra.mxu0 %v101
    %207 = vmatprep.subr.bf16.mxu0 0
    %208 = vmatpush1.bf16.msra.mxu0 %v102
    %209 = vmatprep.subr.bf16.mxu0 0
    %210 = vmatpush1.bf16.msra.mxu0 %v103
    %211 = vmatprep.subr.bf16.mxu0 0
    %212 = vmatpush1.bf16.msra.mxu0 %v104
    %213 = vmatprep.subr.bf16.mxu0 0
    %214 = vmatpush1.bf16.msra.mxu0 %v105
    %215 = vmatprep.subr.bf16.mxu0 0
    %216 = vmatpush1.bf16.msra.mxu0 0
    %217 = vmatprep.subr.bf16.mxu0 0
    %218 = vmatpush1.bf16.msra.mxu0 0
    %219 = vmatprep.subr.bf16.mxu0 0
    %220 = vmatpush1.bf16.msra.mxu0 0
    %221 = vmatprep.subr.bf16.mxu0 0
    %222 = vmatpush1.bf16.msra.mxu0 0
    %223 = vmatprep.subr.bf16.mxu0 0
    %224 = vmatpush1.bf16.msra.mxu0 0
    %225 = vmatprep.subr.bf16.mxu0 0
    %226 = vmatpush1.bf16.msra.mxu0 0
    %227 = vmatprep.subr.bf16.mxu0 0
    %228 = vmatpush1.bf16.msra.mxu0 0
    %229 = vmatprep.subr.bf16.mxu0 0
    %230 = vmatpush1.bf16.msra.mxu0 0
    %231 = vmatprep.mubr.bf16.mxu0 0
    %232 = vmatmul.mubr.bf16.gmra.mrb[0].mxu0 %v198
    %v233 = vpop.f32.mrb[0].mxu0
    %v234 = vadd.f32 0.0, %v233
    %v235 = vpop.f32.mrb[0].mxu0
    %v236 = vpop.f32.mrb[0].mxu0
    %v237 = vpop.f32.mrb[0].mxu0
    %238 = vdwg.mxu0
    %239 = vmatprep.subr.bf16.mxu0 0
    %240 = vmatpush1.bf16.msra.mxu0 %v98
    %241 = vmatprep.subr.bf16.mxu0 0
    %242 = vmatpush1.bf16.msra.mxu0 %v99
    %243 = vmatprep.subr.bf16.mxu0 0
    %244 = vmatpush1.bf16.msra.mxu0 %v100
    %245 = vmatprep.subr.bf16.mxu0 0
    %246 = vmatpush1.bf16.msra.mxu0 %v101
    %247 = vmatprep.subr.bf16.mxu0 0
    %248 = vmatpush1.bf16.msra.mxu0 %v102
    %249 = vmatprep.subr.bf16.mxu0 0
    %250 = vmatpush1.bf16.msra.mxu0 %v103
    %251 = vmatprep.subr.bf16.mxu0 0
    %252 = vmatpush1.bf16.msra.mxu0 %v104
    %253 = vmatprep.subr.bf16.mxu0 0
    %254 = vmatpush1.bf16.msra.mxu0 %v105
    %255 = vmatprep.subr.bf16.mxu0 0
    %256 = vmatpush1.bf16.msra.mxu0 0
    %257 = vmatprep.subr.bf16.mxu0 0
    %258 = vmatpush1.bf16.msra.mxu0 0
    %259 = vmatprep.subr.bf16.mxu0 0
    %260 = vmatpush1.bf16.msra.mxu0 0
    %261 = vmatprep.subr.bf16.mxu0 0
    %262 = vmatpush1.bf16.msra.mxu0 0
    %263 = vmatprep.subr.bf16.mxu0 0
    %264 = vmatpush1.bf16.msra.mxu0 0
    %265 = vmatprep.subr.bf16.mxu0 0
    %266 = vmatpush1.bf16.msra.mxu0 0
    %267 = vmatprep.subr.bf16.mxu0 0
    %268 = vmatpush1.bf16.msra.mxu0 0
    %269 = vmatprep.subr.bf16.mxu0 0
    %270 = vmatpush1.bf16.msra.mxu0 0
    %271 = vmatprep.mubr.bf16.mxu0 0
    %272 = vmatmul.mubr.bf16.gmra.mrb[0].mxu0 %v195
    %v273 = vpop.f32.mrb[0].mxu0
    %v274 = vadd.f32 %v234, %v273
    %v275 = vpop.f32.mrb[0].mxu0
    %v276 = vpop.f32.mrb[0].mxu0
    %v277 = vpop.f32.mrb[0].mxu0
    %278 = vdwg.mxu0
    %v279 = vmul.f32 %v189, 0.03125
    %v280 = vmul.f32 %v274, 0.03125
    %v281 = vmul.f32 %v279, %v279
    %v282 = vsub.f32 %v280, %v281
    %v283 = vmax.f32 %v282, 0.0
    %v284 = vadd.f32 %v283, 1e-05
    %v285 = vrsqrt.pop %v284
    %v286 = vld [vmem:[%s1] sm:$0x1]
    %v287 = vld [vmem:[%s2] sm:$0x1]
    %v288 = vsub.f32 %v45, %v279
    %v289 = vmul.f32 %v288, %v285
    %v291 = vlaneseq
    %v292 = vshrl.u32 %v291, 7
    %v293 = vsub.s32 0, %v292
    %v294 = vrot.slane %v286, %v293
    %v296 = vmul.f32 %v289, %v294
    %v298 = vlaneseq
    %v299 = vshrl.u32 %v298, 7
    %v300 = vsub.s32 0, %v299
    %v301 = vrot.slane %v287, %v300
    %v303 = vadd.f32 %v296, %v301
    %304 = vst [vmem:[#allocation7] sm:$0xff] %v303
    // Predicated region
    $region26: #{tpu_custom_call.1} parent=1 // pred_check
      _
    $region27: #{tpu_custom_call.1} parent=1 // pred_check_branch
      %306 = sbr.rel (0) target = $region29
    $region28: #{tpu_custom_call.1} parent=1 // pred_region
      %s308 = ssub.s32 128, 128
      %309 = vsyncadd [#allocation4], %s308
      %s311 = sshll.u32 [#allocation7], 4
      %s312 = int_to_ptr.vmem [resolvable:$true] %s311
      %314 = dma.vmem_to_hbm [thread:$0]  %s312, 128, %s4, [#allocation4]
    $region29: #{tpu_custom_call.1} parent=1 // pred_fallthru
      _
    // Predicated region
    $region30: #{tpu_custom_call.1} parent=1 // pred_check
      _
    $region31: #{tpu_custom_call.1} parent=1 // pred_check_branch
      %316 = sbr.rel (0) target = $region33
    $region32: #{tpu_custom_call.1} parent=1 // pred_region
      %317 = dma.done [#allocation4], 128
    $region33: #{tpu_custom_call.1} parent=1 // pred_fallthru
      _
    %318 = vsyncpa [#allocation3], 1
    %319 = vsyncpa [#allocation6], 1
    %320 = vsyncpa [#allocation4], 1

</llo_original>
